<compile_context>
chip_gen: v7x
topology: tpu7x:2x2x1
jax: 0.10.0
libtpu: 0.0.40
codegen_flags: <defaults>
</compile_context>

<pallas_src>
import functools

import jax
import jax.numpy as jnp
import numpy as np
from jax.experimental import pallas as pl
from jax.experimental.pallas import tpu as pltpu


def _round_up(x: int, m: int) -> int:
    return ((x + m - 1) // m) * m


def _row_tile(n: int) -> int:
    # 256-row blocks keep the MXU fed (multiple of v5e's 128 and v6e/v7x's 256);
    # tiny batches get a single block, rounded to 16 for bf16 sublane packing.
    return 256 if n > 256 else _round_up(max(n, 1), 16)


def _col_tile(n: int) -> int:
    # Lane-aligned column tiles.  Up to 1024 columns use a single tile (zero
    # padding waste); beyond that a fixed 512-wide tile keeps every live
    # (TM, TN) f32 temporary at 0.5 MiB so per-step VMEM is N-independent.
    n128 = _round_up(max(n, 1), 128)
    return n128 if n128 <= 1024 else 512


def _pad_to(x, shape, fill=0):
    pads = [(0, t - s) for s, t in zip(x.shape, shape)]
    if all(p == (0, 0) for p in pads):
        return x
    return jnp.pad(x, pads, constant_values=fill)


def _vmem_limit_bytes() -> int:
    # Generation-aware: v5e/v6e have 128 MiB physical VMEM, v7x only 64 MiB.
    # Column blocking keeps per-step usage small; this is just headroom for
    # double-buffered (TM, D) / (D, TN) tiles at large feature dims.
    phys = 64 * 1024 * 1024
    try:
        phys = int(getattr(pltpu.get_tpu_info(), "vmem_capacity_bytes", phys)) or phys
    except Exception:
        pass
    return min(96 * 1024 * 1024, (phys * 3) // 4)


def _compiler_params(dim_sem):
    return pltpu.CompilerParams(dimension_semantics=dim_sem,
                                vmem_limit_bytes=_vmem_limit_bytes())


# -----------------------------------------------------------------------------
# Triplet-style contrastive loss kernel.
# Grid: (row blocks ["parallel"], column tiles ["arbitrary"]).  The (TM,1)
# outputs have a column-invariant index_map, so they stay VMEM-resident across
# the column sweep and act as per-row accumulators.
# -----------------------------------------------------------------------------
def _triplet_kernel(f_row_ref, f_colT_ref, tcol_ref, trow_ref, newrow_ref,
                    pos_ref, neg_ref, *, tm, tn, k_new, margin, epsilon):
    i = pl.program_id(0)                      # row block
    j = pl.program_id(1)                      # column tile (innermost)

    @pl.when(j == 0)
    def _init():
        pos_ref[...] = jnp.zeros_like(pos_ref)
        neg_ref[...] = jnp.zeros_like(neg_ref)

    # (TM, TN) similarity tile on the MXU: (TM, D) x (D, TN), f32 accumulation.
    sim = jax.lax.dot_general(f_row_ref[...], f_colT_ref[...],
                              (((1,), (0,)), ((), ())),
                              preferred_element_type=jnp.float32)

    same = tcol_ref[...] == trow_ref[...]                       # (TM, TN) bool
    new_c = newrow_ref[...] > 0                                 # (1, TN)  bool

    row = i * tm + jax.lax.broadcasted_iota(jnp.int32, (tm, 1), 0)
    col = j * tn + jax.lax.broadcasted_iota(jnp.int32, (1, tn), 1)
    offdiag = row != col

    all_new = (i + 1) * tm <= k_new      # every row of this block is "new"
    all_old = i * tm >= k_new            # every row of this block is "old"

    # Positive pairs (only rows < k_new ever use them): same label, new_idx
    # column, not the self pair, sim < 1 - eps.  The explicit i==j exclusion
    # keeps bf16 MXU rounding of the (unit-norm) diagonal from leaking self
    # pairs past the reference's `< 1 - eps` filter.  Column padding is inert:
    # padded labels never match and padded columns are not in new_idx.
    @pl.when(jnp.logical_not(all_old))
    def _pos():
        pos_mask = jnp.logical_and(
            jnp.logical_and(same, new_c),
            jnp.logical_and(offdiag, sim < (1.0 - epsilon)))
        pos_ref[...] += jnp.sum(jnp.where(pos_mask, 1.0 - sim, 0.0),
                                axis=1, keepdims=True)

    # Negative pairs: different label and sim > margin.  One fused base pass;
    # padded columns contribute 0 (zero features -> sim == 0 < margin).
    neg_base = jnp.where(jnp.logical_and(jnp.logical_not(same), sim > margin),
                         sim, 0.0)

    @pl.when(all_new)
    def _neg_new():          # rows < k_new: negatives over ALL columns
        neg_ref[...] += jnp.sum(neg_base, axis=1, keepdims=True)

    @pl.when(all_old)
    def _neg_old():          # rows >= k_new: negatives over new_idx columns only
        neg_ref[...] += jnp.sum(jnp.where(new_c, neg_base, 0.0),
                                axis=1, keepdims=True)

    @pl.when(jnp.logical_and(jnp.logical_not(all_new), jnp.logical_not(all_old)))
    def _neg_straddle():     # single block straddling k_new: per-row select
        s_all = jnp.sum(neg_base, axis=1, keepdims=True)
        s_new = jnp.sum(jnp.where(new_c, neg_base, 0.0), axis=1, keepdims=True)
        neg_ref[...] += jnp.where(row < k_new, s_all, s_new)


# -----------------------------------------------------------------------------
# Supervised InfoNCE (SupCon) kernel — per-row mean_log_prob_pos.
# Grid: (row blocks ["parallel"], phase ["arbitrary"], column tiles ["arbitrary"]).
# Two passes over the column tiles: pass 1 row max, pass 2 clamped-exp
# denominator + masked raw-logit sum + positive count.  With a single column
# tile the wrapper sets the phase extent to 1 and both passes run back-to-back.
# -----------------------------------------------------------------------------
def _infonce_kernel(f_row_ref, f_colT_ref, tcol_ref, trow_ref, o_ref,
                    m_sc, s_sc, c_sc, d_sc, *, tm, tn, n_valid):
    i = pl.program_id(0)
    p = pl.program_id(1)
    j = pl.program_id(2)
    n_phase = pl.num_programs(1)
    n_cols = pl.num_programs(2)

    @pl.when(jnp.logical_and(p == 0, j == 0))
    def _init():
        m_sc[...] = jnp.full_like(m_sc, -jnp.inf)
        s_sc[...] = jnp.zeros_like(s_sc)
        c_sc[...] = jnp.zeros_like(c_sc)
        d_sc[...] = jnp.zeros_like(d_sc)

    # Raw logits tile (1/temperature already folded into f_row by the wrapper).
    raw = jax.lax.dot_general(f_row_ref[...], f_colT_ref[...],
                              (((1,), (0,)), ((), ())),
                              preferred_element_type=jnp.float32)     # (TM, TN)

    row = i * tm + jax.lax.broadcasted_iota(jnp.int32, (tm, 1), 0)
    col = j * tn + jax.lax.broadcasted_iota(jnp.int32, (1, tn), 1)
    valid = col < n_valid                       # mask out padded columns
    offdiag = row != col

    # Pass 1: running row max over REAL columns (diagonal included, exactly as
    # the reference's torch.max over the un-masked logits).
    @pl.when(p == 0)
    def _pass1():
        m_sc[...] = jnp.maximum(
            m_sc[...],
            jnp.max(jnp.where(valid, raw, -jnp.inf), axis=1, keepdims=True))

    # Pass 2: denominator + masked raw-logit sum + count with the complete max.
    @pl.when(p == n_phase - 1)
    def _pass2():
        same = tcol_ref[...] == trow_ref[...]
        mask = jnp.logical_and(jnp.logical_and(same, offdiag), valid)
        s_sc[...] += jnp.sum(jnp.where(mask, raw, 0.0), axis=1, keepdims=True)
        c_sc[...] += jnp.sum(mask.astype(jnp.float32), axis=1, keepdims=True)
        # clamp(exp(logits) * logits_mask, min=0.001) summed over REAL columns
        # (the masked diagonal still contributes its clamped 0.001, as in torch).
        e = jnp.maximum(jnp.where(offdiag, jnp.exp(raw - m_sc[...]), 0.0), 0.001)
        d_sc[...] += jnp.sum(jnp.where(valid, e, 0.0), axis=1, keepdims=True)

    @pl.when(jnp.logical_and(p == n_phase - 1, j == n_cols - 1))
    def _finalize():
        # log_prob folded algebraically:
        #   mean_log_prob_pos = sum_mask(raw)/cnt - rowmax - log(denominator)
        # Rows with a batch-unique label (cnt == 0) yield NaN exactly like the
        # reference (whose isnan assert would then fire); padded rows also give
        # NaN but are sliced off by the wrapper.
        o_ref[...] = s_sc[...] / c_sc[...] - m_sc[...] - jnp.log(d_sc[...])


class Loss:
    """JAX/Pallas port of the PyTorch supervised-contrastive Loss module."""

    def __init__(self, n_views: int, is_supervised: bool,
                 temperature: float = 0.07, type: str = 'triplet',
                 matmul_dtype=jnp.bfloat16, debug_checks: bool = False) -> None:
        assert is_supervised, 'Implementation not checked for unsupervised computations.'
        assert type in ['triplet', 'infonce']
        self.n_views = n_views
        self.temperature = temperature
        self.is_supervised = is_supervised
        self.type = type
        print('using ' + type + ' as loss function')
        self.margin = 0.5
        self.alpha = 0.5
        # bf16 MXU operands with f32 accumulation (pass jnp.float32 for
        # bit-closer similarity values); all masking / softmax math is f32.
        self.matmul_dtype = matmul_dtype
        # The reference's host-syncing NaN assert is opt-in.
        self.debug_checks = debug_checks

    def forward(self, feature, target, new_idx, old_idx):
        if self.type == 'triplet':
            return self.forward_triplet(feature, target, new_idx, old_idx)
        elif self.type == 'infonce':
            return self.forward_infonce(feature, target)

    # --- triplet path -------------------------------------------------------
    def forward_triplet(self, feature, target, new_idx, old_idx):
        if old_idx.shape[0] != 0:       # reference mutates the attribute; the
            self.alpha = 0.9            # value actually used is read locally.
        alpha = float(self.alpha)

        n, d = feature.shape
        k_new = int(new_idx.shape[0])
        assert k_new >= 1               # the reference loop would NameError otherwise

        tm, tn = _row_tile(n), _col_tile(n)
        n_rows, n_cols = _round_up(n, tm), _round_up(n, tn)
        grid = (n_rows // tm, n_cols // tn)

        i32min = jnp.iinfo(jnp.int32).min
        f = feature.astype(self.matmul_dtype)
        f_row = _pad_to(f, (n_rows, d))                       # row-blocked LHS
        f_colT = _pad_to(f.T, (d, n_cols))                    # (D, N) stationary RHS
        tcol = _pad_to(target.astype(jnp.int32).reshape(n, 1), (n_rows, 1), i32min)
        trow = _pad_to(target.astype(jnp.int32).reshape(1, n), (1, n_cols), i32min)
        # TODO(synk): new_idx gathers are lowered to a per-column membership
        # mask; duplicate indices in new_idx (which would double-count in the
        # reference) are not reproduced.
        newrow = _pad_to(jnp.zeros((1, n), jnp.int32).at[0, new_idx].set(1),
                         (1, n_cols))

        kernel = functools.partial(_triplet_kernel, tm=tm, tn=tn, k_new=k_new,
                                   margin=float(self.margin), epsilon=1e-05)

        pos_out, neg_out = pl.pallas_call(
            kernel,
            grid=grid,
            in_specs=[
                pl.BlockSpec((tm, d), lambda i, j: (i, 0)),   # feature rows
                pl.BlockSpec((d, tn), lambda i, j: (0, j)),   # features, pre-transposed
                pl.BlockSpec((tm, 1), lambda i, j: (i, 0)),   # labels (rows)
                pl.BlockSpec((1, tn), lambda i, j: (0, j)),   # labels (cols)
                pl.BlockSpec((1, tn), lambda i, j: (0, j)),   # new_idx column mask
            ],
            out_specs=[
                pl.BlockSpec((tm, 1), lambda i, j: (i, 0)),
                pl.BlockSpec((tm, 1), lambda i, j: (i, 0)),
            ],
            out_shape=[
                jax.ShapeDtypeStruct((n_rows, 1), jnp.float32),
                jax.ShapeDtypeStruct((n_rows, 1), jnp.float32),
            ],
            compiler_params=_compiler_params(("parallel", "arbitrary")),
        )(f_row, f_colT, tcol, trow, newrow)

        # Tiny O(N) XLA epilogue: the reference reuses the *stale* pos_pair_ of
        # row k_new-1 for every row >= k_new, then alpha-blends and averages.
        pos = pos_out[:n, 0]
        neg = neg_out[:n, 0]
        pos_final = jnp.where(jnp.arange(n) < k_new, pos, pos[k_new - 1])
        return jnp.sum(alpha * pos_final + (1.0 - alpha) * neg) / n

    # --- infonce path -------------------------------------------------------
    def forward_infonce(self, features, labels=None, mask=None):
        n, d = features.shape
        tm, tn = _row_tile(n), _col_tile(n)
        n_rows, n_cols = _round_up(n, tm), _round_up(n, tn)
        num_col_blocks = n_cols // tn
        # The clamp(exp(logits - rowmax), min=0.001) is not rescalable online,
        # so column blocking needs two passes; a single column tile collapses
        # the phase axis to 1 (one sweep, one matmul per tile).
        n_phase = 1 if num_col_blocks == 1 else 2
        grid = (n_rows // tm, n_phase, num_col_blocks)

        i32min = jnp.iinfo(jnp.int32).min
        inv_t = 1.0 / float(self.temperature)
        # Fold 1/temperature into the O(N*D) row-operand cast instead of
        # scaling every (TM, TN) logits tile in-kernel.
        f_row = _pad_to((features * inv_t).astype(self.matmul_dtype), (n_rows, d))
        f_colT = _pad_to(features.astype(self.matmul_dtype).T, (d, n_cols))
        tcol = _pad_to(labels.astype(jnp.int32).reshape(n, 1), (n_rows, 1), i32min)
        trow = _pad_to(labels.astype(jnp.int32).reshape(1, n), (1, n_cols), i32min)

        kernel = functools.partial(_infonce_kernel, tm=tm, tn=tn, n_valid=n)

        mlpp = pl.pallas_call(
            kernel,
            grid=grid,
            in_specs=[
                pl.BlockSpec((tm, d), lambda i, p, j: (i, 0)),
                pl.BlockSpec((d, tn), lambda i, p, j: (0, j)),
                pl.BlockSpec((tm, 1), lambda i, p, j: (i, 0)),
                pl.BlockSpec((1, tn), lambda i, p, j: (0, j)),
            ],
            out_specs=pl.BlockSpec((tm, 1), lambda i, p, j: (i, 0)),
            out_shape=jax.ShapeDtypeStruct((n_rows, 1), jnp.float32),
            scratch_shapes=[pltpu.VMEM((tm, 1), jnp.float32)] * 4,  # m, s, c, d
            compiler_params=_compiler_params(("parallel", "arbitrary", "arbitrary")),
        )(f_row, f_colT, tcol, trow)

        loss = -jnp.mean(mlpp[:n, 0])
        if self.debug_checks:           # reference's _assert_isnan (host sync)
            assert not bool(jnp.any(jnp.isnan(loss)))
        return loss


# --- pure NumPy references (transcriptions of the PyTorch module) ------------
def _ref_triplet(feature, target, new_idx, margin, alpha):
    f = np.asarray(feature, np.float32)
    t = np.asarray(target)
    new_idx = np.asarray(new_idx)
    sim = f @ f.T
    n = f.shape[0]
    k_new = new_idx.shape[0]
    eps = 1e-05
    total = 0.0
    pos_pair_ = None
    for i in range(n):
        if i < k_new:
            pp = sim[i][new_idx][t[i] == t[new_idx]]
            pos_pair_ = pp[pp < 1 - eps]
            nn = sim[i][t[i] != t]
            neg = nn[nn > margin]
        else:
            nn = sim[i][new_idx][t[i] != t[new_idx]]
            neg = nn[nn > margin]
        pos_loss = float(np.sum(1.0 - pos_pair_))
        neg_loss = float(np.sum(neg)) if len(neg) > 0 else 0.0
        total += alpha * pos_loss + (1.0 - alpha) * neg_loss
    return total / n


def _ref_infonce(features, labels, temperature):
    f = np.asarray(features, np.float32)
    lab = np.asarray(labels)
    n = f.shape[0]
    adc = (f @ f.T) / temperature
    logits = adc - adc.max(axis=1, keepdims=True)
    logits_mask = 1.0 - np.eye(n, dtype=np.float32)
    mask = (lab[:, None] == lab[None, :]).astype(np.float32) * logits_mask
    exp_logits = np.maximum(np.exp(logits) * logits_mask, 0.001)
    log_prob = logits - np.log(exp_logits.sum(axis=1, keepdims=True))
    mlpp = (mask * log_prob).sum(axis=1) / mask.sum(axis=1)
    return float(-mlpp.mean())


if __name__ == "__main__":
    key = jax.random.PRNGKey(0)
    N, D = 8, 32

    feature = jax.random.normal(key, (N, D), jnp.float32)
    feature = feature / jnp.linalg.norm(feature, axis=1, keepdims=True)
    # Round to the bf16 grid so the NumPy references see the exact operands the
    # MXU multiplies (f32 accumulation then matches to ~1e-6).
    feature = feature.astype(jnp.bfloat16).astype(jnp.float32)

    target = jnp.array([0, 0, 1, 1, 2, 2, 0, 1], dtype=jnp.int32)
    new_idx = jnp.arange(5, dtype=jnp.int32)       # first 5 samples are "new"
    old_idx = jnp.arange(5, 8, dtype=jnp.int32)    # non-empty -> alpha = 0.9

    loss_triplet = Loss(n_views=2, is_supervised=True, type='triplet')
    loss_infonce = Loss(n_views=2, is_supervised=True, type='infonce')

    l_tri = loss_triplet.forward(feature, target, new_idx, old_idx)
    l_nce = loss_infonce.forward(feature, target, new_idx, old_idx)
    jax.block_until_ready((l_tri, l_nce))

    r_tri = _ref_triplet(feature, target, new_idx, margin=0.5, alpha=0.9)
    r_nce = _ref_infonce(feature, target, temperature=0.07)

    assert not bool(jnp.isnan(l_tri)) and not bool(jnp.isnan(l_nce))
    # Triplet matches up to MXU accumulation order (+ explicit self-pair
    # exclusion); InfoNCE additionally folds 1/temperature into the bf16 row
    # operand, so allow a few percent.
    assert abs(float(l_tri) - r_tri) < 2e-2, (float(l_tri), r_tri)
    assert abs(float(l_nce) - r_nce) < 0.08 * abs(r_nce) + 0.08, (float(l_nce), r_nce)

    print("KERNEL_OK")
</pallas_src>

<mosaic_0001>
module attributes {stable_mosaic.version = 11 : i64} {
  func.func @_triplet_kernel(%arg0: i32, %arg1: i32, %arg2: memref<16x32xbf16, #tpu.memory_space<vmem>>, %arg3: memref<32x128xbf16, #tpu.memory_space<vmem>>, %arg4: memref<16x1xi32, #tpu.memory_space<vmem>>, %arg5: memref<1x128xi32, #tpu.memory_space<vmem>>, %arg6: memref<1x128xi32, #tpu.memory_space<vmem>>, %arg7: memref<16x1xf32, #tpu.memory_space<vmem>>, %arg8: memref<16x1xf32, #tpu.memory_space<vmem>>) attributes {dimension_semantics = [#tpu.dimension_semantics<parallel>, #tpu.dimension_semantics<arbitrary>], iteration_bounds = array<i64: 1, 1>, scalar_prefetch = 0 : i64, scratch_operands = 0 : i64, tpu.core_type = #tpu.core_type<tc>, window_params = [{transform_indices = @transform_0, window_bounds = array<i64: 16, 32>}, {transform_indices = @transform_1, window_bounds = array<i64: 32, 128>}, {transform_indices = @transform_2, window_bounds = array<i64: 16, 1>}, {transform_indices = @transform_3, window_bounds = array<i64: 1, 128>}, {transform_indices = @transform_4, window_bounds = array<i64: 1, 128>}, {transform_indices = @transform_5, window_bounds = array<i64: 16, 1>}, {transform_indices = @transform_6, window_bounds = array<i64: 16, 1>}]} {
    %c0_i32 = arith.constant 0 : i32
    %0 = arith.cmpi eq, %arg1, %c0_i32 : i32
    %1 = arith.extui %0 : i1 to i32
    %c0_i32_0 = arith.constant 0 : i32
    %2 = arith.cmpi ne, %1, %c0_i32_0 : i32
    scf.if %2 {
      %cst_23 = arith.constant 0.000000e+00 : f32
      %48 = vector.broadcast %cst_23 : f32 to vector<16x1xf32>
      %c0_24 = arith.constant 0 : index
      %c0_25 = arith.constant 0 : index
      %49 = vector.load %arg7[%c0_24, %c0_25] : memref<16x1xf32, #tpu.memory_space<vmem>>, vector<16x1xf32>
      tpu.vector_store %arg7[%c0_24, %c0_25], %48 {strides = array<i32>} : memref<16x1xf32, #tpu.memory_space<vmem>>, vector<16x1xf32>,
      %cst_26 = arith.constant 0.000000e+00 : f32
      %50 = vector.broadcast %cst_26 : f32 to vector<16x1xf32>
      %c0_27 = arith.constant 0 : index
      %c0_28 = arith.constant 0 : index
      %51 = vector.load %arg8[%c0_27, %c0_28] : memref<16x1xf32, #tpu.memory_space<vmem>>, vector<16x1xf32>
      tpu.vector_store %arg8[%c0_27, %c0_28], %50 {strides = array<i32>} : memref<16x1xf32, #tpu.memory_space<vmem>>, vector<16x1xf32>,
    } else {
    }
    %c0 = arith.constant 0 : index
    %c0_1 = arith.constant 0 : index
    %3 = vector.load %arg2[%c0, %c0_1] : memref<16x32xbf16, #tpu.memory_space<vmem>>, vector<16x32xbf16>
    %c0_2 = arith.constant 0 : index
    %c0_3 = arith.constant 0 : index
    %4 = vector.load %arg3[%c0_2, %c0_3] : memref<32x128xbf16, #tpu.memory_space<vmem>>, vector<32x128xbf16>
    %cst = arith.constant dense<0.000000e+00> : vector<16x128xf32>
    %5 = tpu.matmul %3, %4, %cst {dimension_numbers = #tpu.dot_dimension_numbers<[1], [0], [0], [1], [0, 0, 1, 1], [], []>} : vector<16x32xbf16>, vector<32x128xbf16>, vector<16x128xf32> -> vector<16x128xf32>
    %c0_4 = arith.constant 0 : index
    %c0_5 = arith.constant 0 : index
    %6 = vector.load %arg4[%c0_4, %c0_5] : memref<16x1xi32, #tpu.memory_space<vmem>>, vector<16x1xi32>
    %c0_6 = arith.constant 0 : index
    %c0_7 = arith.constant 0 : index
    %7 = vector.load %arg5[%c0_6, %c0_7] : memref<1x128xi32, #tpu.memory_space<vmem>>, vector<1x128xi32>
    %8 = vector.broadcast %6 : vector<16x1xi32> to vector<16x128xi32>
    %9 = vector.broadcast %7 : vector<1x128xi32> to vector<16x128xi32>
    %10 = arith.cmpi eq, %8, %9 : vector<16x128xi32>
    %c0_8 = arith.constant 0 : index
    %c0_9 = arith.constant 0 : index
    %11 = vector.load %arg6[%c0_8, %c0_9] : memref<1x128xi32, #tpu.memory_space<vmem>>, vector<1x128xi32>
    %c0_i32_10 = arith.constant 0 : i32
    %12 = vector.broadcast %c0_i32_10 : i32 to vector<1x128xi32>
    %13 = arith.cmpi sgt, %11, %12 : vector<1x128xi32>
    %c16_i32 = arith.constant 16 : i32
    %14 = arith.muli %arg0, %c16_i32 : i32
    %15 = tpu.iota {dimensions = array<i32: 0>} : vector<16x1xi32>
    %16 = vector.broadcast %14 : i32 to vector<16x1xi32>
    %17 = arith.addi %16, %15 : vector<16x1xi32>
    %c128_i32 = arith.constant 128 : i32
    %18 = arith.muli %arg1, %c128_i32 : i32
    %19 = tpu.iota {dimensions = array<i32: 1>} : vector<1x128xi32>
    %20 = vector.broadcast %18 : i32 to vector<1x128xi32>
    %21 = arith.addi %20, %19 : vector<1x128xi32>
    %22 = vector.broadcast %17 : vector<16x1xi32> to vector<16x128xi32>
    %23 = vector.broadcast %21 : vector<1x128xi32> to vector<16x128xi32>
    %24 = arith.cmpi ne, %22, %23 : vector<16x128xi32>
    %c1_i32 = arith.constant 1 : i32
    %25 = arith.addi %arg0, %c1_i32 : i32
    %c16_i32_11 = arith.constant 16 : i32
    %26 = arith.muli %25, %c16_i32_11 : i32
    %c5_i32 = arith.constant 5 : i32
    %27 = arith.cmpi sle, %26, %c5_i32 : i32
    %c16_i32_12 = arith.constant 16 : i32
    %28 = arith.muli %arg0, %c16_i32_12 : i32
    %c5_i32_13 = arith.constant 5 : i32
    %29 = arith.cmpi sge, %28, %c5_i32_13 : i32
    %true = arith.constant true
    %30 = arith.xori %29, %true : i1
    %31 = arith.extui %30 : i1 to i32
    %c0_i32_14 = arith.constant 0 : i32
    %32 = arith.cmpi ne, %31, %c0_i32_14 : i32
    scf.if %32 {
      %48 = vector.broadcast %13 : vector<1x128xi1> to vector<16x128xi1>
      %49 = arith.andi %10, %48 : vector<16x128xi1>
      %cst_23 = arith.constant 0.999989986 : f32
      %50 = vector.broadcast %cst_23 : f32 to vector<16x128xf32>
      %51 = arith.cmpf olt, %5, %50 : vector<16x128xf32>
      %52 = arith.andi %24, %51 : vector<16x128xi1>
      %53 = arith.andi %49, %52 : vector<16x128xi1>
      %c0_24 = arith.constant 0 : index
      %c0_25 = arith.constant 0 : index
      %54 = vector.load %arg7[%c0_24, %c0_25] : memref<16x1xf32, #tpu.memory_space<vmem>>, vector<16x1xf32>
      %cst_26 = arith.constant 1.000000e+00 : f32
      %55 = vector.broadcast %cst_26 : f32 to vector<16x128xf32>
      %56 = arith.subf %55, %5 : vector<16x128xf32>
      %cst_27 = arith.constant 0.000000e+00 : f32
      %57 = vector.broadcast %cst_27 : f32 to vector<16x128xf32>
      %58 = arith.select %53, %56, %57 : vector<16x128xi1>, vector<16x128xf32>
      %cst_28 = arith.constant dense<0.000000e+00> : vector<16xf32>
      %59 = vector.multi_reduction <add>, %58, %cst_28 [1] : vector<16x128xf32> to vector<16xf32>
      %60 = vector.shape_cast %59 : vector<16xf32> to vector<16x1xf32>
      %61 = arith.addf %54, %60 : vector<16x1xf32>
      %c0_29 = arith.constant 0 : index
      %c0_30 = arith.constant 0 : index
      %62 = vector.load %arg7[%c0_29, %c0_30] : memref<16x1xf32, #tpu.memory_space<vmem>>, vector<16x1xf32>
      tpu.vector_store %arg7[%c0_29, %c0_30], %61 {strides = array<i32>} : memref<16x1xf32, #tpu.memory_space<vmem>>, vector<16x1xf32>,
    } else {
    }
    %cst_15 = arith.constant dense<true> : vector<16x128xi1>
    %33 = arith.xori %10, %cst_15 : vector<16x128xi1>
    %cst_16 = arith.constant 5.000000e-01 : f32
    %34 = vector.broadcast %cst_16 : f32 to vector<16x128xf32>
    %35 = arith.cmpf ogt, %5, %34 : vector<16x128xf32>
    %36 = arith.andi %33, %35 : vector<16x128xi1>
    %cst_17 = arith.constant 0.000000e+00 : f32
    %37 = vector.broadcast %cst_17 : f32 to vector<16x128xf32>
    %38 = arith.select %36, %5, %37 : vector<16x128xi1>, vector<16x128xf32>
    %39 = arith.extui %27 : i1 to i32
    %c0_i32_18 = arith.constant 0 : i32
    %40 = arith.cmpi ne, %39, %c0_i32_18 : i32
    scf.if %40 {
      %c0_23 = arith.constant 0 : index
      %c0_24 = arith.constant 0 : index
      %48 = vector.load %arg8[%c0_23, %c0_24] : memref<16x1xf32, #tpu.memory_space<vmem>>, vector<16x1xf32>
      %cst_25 = arith.constant dense<0.000000e+00> : vector<16xf32>
      %49 = vector.multi_reduction <add>, %38, %cst_25 [1] : vector<16x128xf32> to vector<16xf32>
      %50 = vector.shape_cast %49 : vector<16xf32> to vector<16x1xf32>
      %51 = arith.addf %48, %50 : vector<16x1xf32>
      %c0_26 = arith.constant 0 : index
      %c0_27 = arith.constant 0 : index
      %52 = vector.load %arg8[%c0_26, %c0_27] : memref<16x1xf32, #tpu.memory_space<vmem>>, vector<16x1xf32>
      tpu.vector_store %arg8[%c0_26, %c0_27], %51 {strides = array<i32>} : memref<16x1xf32, #tpu.memory_space<vmem>>, vector<16x1xf32>,
    } else {
    }
    %41 = arith.extui %29 : i1 to i32
    %c0_i32_19 = arith.constant 0 : i32
    %42 = arith.cmpi ne, %41, %c0_i32_19 : i32
    scf.if %42 {
      %c0_23 = arith.constant 0 : index
      %c0_24 = arith.constant 0 : index
      %48 = vector.load %arg8[%c0_23, %c0_24] : memref<16x1xf32, #tpu.memory_space<vmem>>, vector<16x1xf32>
      %cst_25 = arith.constant 0.000000e+00 : f32
      %49 = vector.shape_cast %13 : vector<1x128xi1> to vector<1x128xi1>
      %50 = vector.broadcast %49 : vector<1x128xi1> to vector<16x128xi1>
      %51 = vector.broadcast %cst_25 : f32 to vector<16x128xf32>
      %52 = arith.select %50, %38, %51 : vector<16x128xi1>, vector<16x128xf32>
      %cst_26 = arith.constant dense<0.000000e+00> : vector<16xf32>
      %53 = vector.multi_reduction <add>, %52, %cst_26 [1] : vector<16x128xf32> to vector<16xf32>
      %54 = vector.shape_cast %53 : vector<16xf32> to vector<16x1xf32>
      %55 = arith.addf %48, %54 : vector<16x1xf32>
      %c0_27 = arith.constant 0 : index
      %c0_28 = arith.constant 0 : index
      %56 = vector.load %arg8[%c0_27, %c0_28] : memref<16x1xf32, #tpu.memory_space<vmem>>, vector<16x1xf32>
      tpu.vector_store %arg8[%c0_27, %c0_28], %55 {strides = array<i32>} : memref<16x1xf32, #tpu.memory_space<vmem>>, vector<16x1xf32>,
    } else {
    }
    %true_20 = arith.constant true
    %43 = arith.xori %27, %true_20 : i1
    %true_21 = arith.constant true
    %44 = arith.xori %29, %true_21 : i1
    %45 = arith.andi %43, %44 : i1
    %46 = arith.extui %45 : i1 to i32
    %c0_i32_22 = arith.constant 0 : i32
    %47 = arith.cmpi ne, %46, %c0_i32_22 : i32
    scf.if %47 {
      %cst_23 = arith.constant dense<0.000000e+00> : vector<16xf32>
      %48 = vector.multi_reduction <add>, %38, %cst_23 [1] : vector<16x128xf32> to vector<16xf32>
      %49 = vector.shape_cast %48 : vector<16xf32> to vector<16x1xf32>
      %cst_24 = arith.constant 0.000000e+00 : f32
      %50 = vector.shape_cast %13 : vector<1x128xi1> to vector<1x128xi1>
      %51 = vector.broadcast %50 : vector<1x128xi1> to vector<16x128xi1>
      %52 = vector.broadcast %cst_24 : f32 to vector<16x128xf32>
      %53 = arith.select %51, %38, %52 : vector<16x128xi1>, vector<16x128xf32>
      %cst_25 = arith.constant dense<0.000000e+00> : vector<16xf32>
      %54 = vector.multi_reduction <add>, %53, %cst_25 [1] : vector<16x128xf32> to vector<16xf32>
      %55 = vector.shape_cast %54 : vector<16xf32> to vector<16x1xf32>
      %c0_26 = arith.constant 0 : index
      %c0_27 = arith.constant 0 : index
      %56 = vector.load %arg8[%c0_26, %c0_27] : memref<16x1xf32, #tpu.memory_space<vmem>>, vector<16x1xf32>
      %c5_i32_28 = arith.constant 5 : i32
      %57 = vector.broadcast %c5_i32_28 : i32 to vector<16x1xi32>
      %58 = arith.cmpi slt, %17, %57 : vector<16x1xi32>
      %59 = arith.select %58, %49, %55 : vector<16x1xi1>, vector<16x1xf32>
      %60 = arith.addf %56, %59 : vector<16x1xf32>
      %c0_29 = arith.constant 0 : index
      %c0_30 = arith.constant 0 : index
      %61 = vector.load %arg8[%c0_29, %c0_30] : memref<16x1xf32, #tpu.memory_space<vmem>>, vector<16x1xf32>
      tpu.vector_store %arg8[%c0_29, %c0_30], %60 {strides = array<i32>} : memref<16x1xf32, #tpu.memory_space<vmem>>, vector<16x1xf32>,
    } else {
    }
    return
  }
  func.func @transform_0(%arg0: i32, %arg1: i32) -> (i32, i32) {
    %c0_i32 = arith.constant 0 : i32
    %c0_i32_0 = arith.constant 0 : i32
    return %arg0, %c0_i32 : i32, i32
  }
  func.func @transform_1(%arg0: i32, %arg1: i32) -> (i32, i32) {
    %c0_i32 = arith.constant 0 : i32
    %c0_i32_0 = arith.constant 0 : i32
    return %c0_i32, %arg1 : i32, i32
  }
  func.func @transform_2(%arg0: i32, %arg1: i32) -> (i32, i32) {
    %c0_i32 = arith.constant 0 : i32
    %c0_i32_0 = arith.constant 0 : i32
    return %arg0, %c0_i32 : i32, i32
  }
  func.func @transform_3(%arg0: i32, %arg1: i32) -> (i32, i32) {
    %c0_i32 = arith.constant 0 : i32
    %c0_i32_0 = arith.constant 0 : i32
    return %c0_i32, %arg1 : i32, i32
  }
  func.func @transform_4(%arg0: i32, %arg1: i32) -> (i32, i32) {
    %c0_i32 = arith.constant 0 : i32
    %c0_i32_0 = arith.constant 0 : i32
    return %c0_i32, %arg1 : i32, i32
  }
  func.func @transform_5(%arg0: i32, %arg1: i32) -> (i32, i32) {
    %c0_i32 = arith.constant 0 : i32
    %c0_i32_0 = arith.constant 0 : i32
    return %arg0, %c0_i32 : i32, i32
  }
  func.func @transform_6(%arg0: i32, %arg1: i32) -> (i32, i32) {
    %c0_i32 = arith.constant 0 : i32
    %c0_i32_0 = arith.constant 0 : i32
    return %arg0, %c0_i32 : i32, i32
  }
}

</mosaic_0001>

<llo_original>
// kernel: tpu_custom_call.1
$region0: #{tpu_custom_call.1}
  #allocation0 [shape = 'u32[]', space=smem, size = 0x4, offset = 0x4, fixed_abs, tag = 'smem constant byte address 0x4 - core index']
  #allocation1 [shape = 'u32[144,128]{1,0:T(1,128)}', space=vmem, size = 0x12000, scoped, tag = 'internal scratch']
  %s0 = inlined_call_operand.hbm [shape: bf16[16,32], index: 0, kind: input, shape index: {}]
  %s1 = inlined_call_operand.vmem [shape: bf16[32,128], index: 1, kind: input, shape index: {}]
  %s2 = inlined_call_operand.vmem [shape: s32[16,1], index: 2, kind: input, shape index: {}]
  %s3 = inlined_call_operand.vmem [shape: s32[1,128], index: 3, kind: input, shape index: {}]
  %s4 = inlined_call_operand.vmem [shape: s32[1,128], index: 4, kind: input, shape index: {}]
  %s5 = inlined_call_operand.vmem [shape: f32[16,1], index: 5, kind: output, shape index: {0}]
  %s6 = inlined_call_operand.vmem [shape: f32[16,1], index: 6, kind: output, shape index: {1}]
  %7 = xla_tuple %s5, %s6
  %s8 = sld [smem:[#allocation0]]
  $region62: #{tpu_custom_call.1} parent=0
    _
  %s10 = ssub.s32 1, %s8
  %s11 = scalar_select 0, %s10, %s8
  $region1: #{tpu_custom_call.1} parent=0
    #allocation2 [shape = 'u8[4096]{0}', space=vmem, size = 0x1000, scoped, tag = 'input window, operand 0, single buffered']
    #allocation3 [shape = 's32[1]{0}', space=sflag, size = 0x4, scoped, tag = 'scoped memory for tpu_custom_call.1']
    %12 = vsyncpa [#allocation3], 0
    // Predicated region
    $region2: #{tpu_custom_call.1} parent=1 // pred_check
      _
    $region3: #{tpu_custom_call.1} parent=1 // pred_check_branch
      %14 = sbr.rel (0) target = $region5
    $region4: #{tpu_custom_call.1} parent=1 // pred_region
      %s16 = ssub.s32 128, 128
      %17 = vsyncadd [#allocation3], %s16
      %s18 = sshll.u32 [#allocation2], 4
      %s19 = int_to_ptr.vmem [resolvable:$true] %s18
      %24 = dma.hbm_to_vmem [thread:$0]  %s0, 128, %s19, [#allocation3], 64, 64, 4
    $region5: #{tpu_custom_call.1} parent=1 // pred_fallthru
      _
    // Predicated region
    $region6: #{tpu_custom_call.1} parent=1 // pred_check
      _
    $region7: #{tpu_custom_call.1} parent=1 // pred_check_branch
      %26 = sbr.rel (0) target = $region9
    $region8: #{tpu_custom_call.1} parent=1 // pred_region
      _
    $region9: #{tpu_custom_call.1} parent=1 // pred_fallthru
      _
    // Predicated region
    $region10: #{tpu_custom_call.1} parent=1 // pred_check
      _
    $region11: #{tpu_custom_call.1} parent=1 // pred_check_branch
      %28 = sbr.rel (0) target = $region13
    $region12: #{tpu_custom_call.1} parent=1 // pred_region
      _
    $region13: #{tpu_custom_call.1} parent=1 // pred_fallthru
      _
    // Predicated region
    $region14: #{tpu_custom_call.1} parent=1 // pred_check
      _
    $region15: #{tpu_custom_call.1} parent=1 // pred_check_branch
      %30 = sbr.rel (0) target = $region17
    $region16: #{tpu_custom_call.1} parent=1 // pred_region
      _
    $region17: #{tpu_custom_call.1} parent=1 // pred_fallthru
      _
    // Predicated region
    $region18: #{tpu_custom_call.1} parent=1 // pred_check
      _
    $region19: #{tpu_custom_call.1} parent=1 // pred_check_branch
      %32 = sbr.rel (0) target = $region21
    $region20: #{tpu_custom_call.1} parent=1 // pred_region
      _
    $region21: #{tpu_custom_call.1} parent=1 // pred_fallthru
      _
    // Predicated region
    $region22: #{tpu_custom_call.1} parent=1 // pred_check
      _
    $region23: #{tpu_custom_call.1} parent=1 // pred_check_branch
      %34 = sbr.rel (0) target = $region25
    $region24: #{tpu_custom_call.1} parent=1 // pred_region
      %35 = dma.done [#allocation3], 128
    $region25: #{tpu_custom_call.1} parent=1 // pred_fallthru
      _
    %p37 = scmp.eq.s32.totalorder 0, 0
    // Predicated region
    $region26: #{tpu_custom_call.1} parent=1 // pred_check
      %p38 = pneg %p37
    $region27: #{tpu_custom_call.1} parent=1 // pred_check_branch
      %40 = sbr.rel (%p38) target = $region29
    $region28: #{tpu_custom_call.1} parent=1 // pred_region
      %vm41 = vcmask 7168
      %42 = vst.msk [vmem:[%s5] sm:$0xff] %vm41, 0.0
      %43 = vst.msk [vmem:[%s5 + $0x8] sm:$0xff] %vm41, 0.0
      %44 = vst.msk [vmem:[%s6] sm:$0xff] %vm41, 0.0
      %45 = vst.msk [vmem:[%s6 + $0x8] sm:$0xff] %vm41, 0.0
    $region29: #{tpu_custom_call.1} parent=1 // pred_fallthru
      _
    %v46 = vld [vmem:[#allocation2] sm:$0xf]
    %v47 = vld [vmem:[#allocation2 + $0x4] sm:$0xf]
    %v48 = vld [vmem:[%s1] sm:$0xf]
    %v49 = vld [vmem:[%s1 + $0x4] sm:$0xf]
    %v50 = vld [vmem:[%s1 + $0x8] sm:$0xf]
    %v51 = vld [vmem:[%s1 + $0xc] sm:$0xf]
    %v54 = vunpack.c.l.b16 %v46
    %v55 = vunpack.c.l.b16 %v47
    %v56 = vpack.c.b16 %v55, %v54
    %v61 = vunpack.c.l.b16 %v48
    %v62 = vunpack.c.l.b16 %v49
    %v63 = vunpack.c.l.b16 %v50
    %v64 = vunpack.c.l.b16 %v51
    %v65 = vpack.c.b16 %v62, %v61
    %v66 = vpack.c.b16 %v64, %v63
    %vm69 = vcmask 261120
    %v71 = vsel %vm69, %v56, 0
    %73 = vmatprep.subr.bf16.mxu0 0
    %74 = vmatpush1.bf16.msra.mxu0 %v65
    %75 = vmatprep.subr.bf16.mxu0 0
    %76 = vmatpush1.bf16.msra.mxu0 %v66
    %77 = vmatprep.subr.bf16.mxu0 0
    %78 = vmatpush1.bf16.msra.mxu0 0
    %79 = vmatprep.subr.bf16.mxu0 0
    %80 = vmatpush1.bf16.msra.mxu0 0
    %81 = vmatprep.subr.bf16.mxu0 0
    %82 = vmatpush1.bf16.msra.mxu0 0
    %83 = vmatprep.subr.bf16.mxu0 0
    %84 = vmatpush1.bf16.msra.mxu0 0
    %85 = vmatprep.subr.bf16.mxu0 0
    %86 = vmatpush1.bf16.msra.mxu0 0
    %87 = vmatprep.subr.bf16.mxu0 0
    %88 = vmatpush1.bf16.msra.mxu0 0
    %89 = vmatprep.subr.bf16.mxu0 0
    %90 = vmatpush1.bf16.msra.mxu0 0
    %91 = vmatprep.subr.bf16.mxu0 0
    %92 = vmatpush1.bf16.msra.mxu0 0
    %93 = vmatprep.subr.bf16.mxu0 0
    %94 = vmatpush1.bf16.msra.mxu0 0
    %95 = vmatprep.subr.bf16.mxu0 0
    %96 = vmatpush1.bf16.msra.mxu0 0
    %97 = vmatprep.subr.bf16.mxu0 0
    %98 = vmatpush1.bf16.msra.mxu0 0
    %99 = vmatprep.subr.bf16.mxu0 0
    %100 = vmatpush1.bf16.msra.mxu0 0
    %101 = vmatprep.subr.bf16.mxu0 0
    %102 = vmatpush1.bf16.msra.mxu0 0
    %103 = vmatprep.subr.bf16.mxu0 0
    %104 = vmatpush1.bf16.msra.mxu0 0
    %105 = vmatprep.mubr.bf16.mxu0 0
    %106 = vmatmul.mubr.bf16.gmra.mrb[0].mxu0 %v71
    %v107 = vpop.f32.mrb[0].mxu0
    %v108 = vadd.f32 0.0, %v107
    %v109 = vpop.f32.mrb[0].mxu0
    %v110 = vpop.f32.mrb[0].mxu0
    %v111 = vadd.f32 0.0, %v110
    %v112 = vpop.f32.mrb[0].mxu0
    %113 = vdwg.mxu0
    %v114 = vld [vmem:[%s2] sm:$0xff]
    %v115 = vld [vmem:[%s2 + $0x8] sm:$0xff]
    %v116 = vld [vmem:[%s3] sm:$0x1]
    %117 = vset.pattern.permute.xlu0 0
    %118 = vperm.xlu0 %117, %v114
    %v119 = vpop.permute.xlu0 %118
    %120 = vset.pattern.permute.xlu0 0
    %121 = vperm.xlu0 %120, %v115
    %v122 = vpop.permute.xlu0 %121
    %v123 = vlaneseq
    %v124 = vshrl.u32 %v123, 7
    %v125 = vsub.s32 0, %v124
    %v126 = vrot.slane %v116, %v125
    %vm127 = vcmp.eq.s32.totalorder %v119, %v126
    %vm128 = vcmp.eq.s32.totalorder %v122, %v126
    %v129 = vld [vmem:[%s4] sm:$0x1]
    %vm130 = vcmp.gt.s32.totalorder %v129, 0
    %s131 = smul.u32 0, 16
    %v132 = vlaneseq
    %v133 = vshrl.u32 %v132, 7
    %v134 = vadd.s32 %v133, 8
    %v135 = vstv %s131
    %v136 = vadd.s32 %v135, %v133
    %v137 = vadd.s32 %v135, %v134
    %s138 = smul.u32 0, 128
    %v139 = vlaneseq
    %v140 = vand.u32 %v139, 127
    %v141 = vstv %s138
    %v142 = vadd.s32 %v141, %v140
    %vm143 = vcmp.ne.s32.totalorder %v136, %v142
    %vm144 = vcmp.ne.s32.totalorder %v137, %v142
    %s145 = sadd.s32 0, 1
    %s146 = smul.u32 %s145, 16
    %p147 = scmp.le.s32.totalorder %s146, 5
    %p148 = scmp.ge.s32.totalorder %s131, 5
    %p149 = scmp.lt.s32.totalorder %s131, 5
    // Predicated region
    $region30: #{tpu_custom_call.1} parent=1 // pred_check
      %p150 = pneg %p149
    $region31: #{tpu_custom_call.1} parent=1 // pred_check_branch
      %152 = sbr.rel (%p150) target = $region33
    $region32: #{tpu_custom_call.1} parent=1 // pred_region
      %v153 = vsel %vm130, 1, 0
      %v154 = vlaneseq
      %v155 = vshrl.u32 %v154, 7
      %v156 = vsub.s32 0, %v155
      %v157 = vrot.slane %v153, %v156
      %vm158 = vcmp.eq.s32.totalorder %v157, 1
      %vm159 = vmand %vm127, %vm158
      %vm160 = vmand %vm128, %vm158
      %vm161 = vcmp.lt.f32.partialorder %v108, 0.99999
      %vm162 = vcmp.lt.f32.partialorder %v111, 0.99999
      %vm163 = vmand %vm143, %vm161
      %vm164 = vmand %vm144, %vm162
      %vm165 = vmand %vm159, %vm163
      %vm166 = vmand %vm160, %vm164
      %v167 = vld [vmem:[%s5] sm:$0xff]
      %v168 = vld [vmem:[%s5 + $0x8] sm:$0xff]
      %v169 = vsub.f32 1.0, %v108
      %v170 = vsub.f32 1.0, %v111
      %v171 = vsel %vm165, %v169, 0.0
      %v172 = vsel %vm166, %v170, 0.0
      %173 = vadd.xlane.f32.xlu0 %v171
      %v174 = vpop.xlane.xlu0 %173
      %175 = vadd.xlane.f32.xlu0 %v172
      %v176 = vpop.xlane.xlu0 %175
      %v177 = vadd.f32 %v167, %v174
      %v178 = vadd.f32 %v168, %v176
      %vm179 = vcmask 7168
      %180 = vst.msk [vmem:[%s5] sm:$0xff] %vm179, %v177
      %181 = vst.msk [vmem:[%s5 + $0x8] sm:$0xff] %vm179, %v178
    $region33: #{tpu_custom_call.1} parent=1 // pred_fallthru
      _
    %vm182 = vmxor %vm127, 1
    %vm183 = vmxor %vm128, 1
    %vm184 = vcmp.gt.f32.partialorder %v108, 0.5
    %vm185 = vcmp.gt.f32.partialorder %v111, 0.5
    %vm186 = vmand %vm182, %vm184
    %vm187 = vmand %vm183, %vm185
    %v188 = vsel %vm186, %v108, 0.0
    %v189 = vsel %vm187, %v111, 0.0
    // Predicated region
    $region34: #{tpu_custom_call.1} parent=1 // pred_check
      %p190 = pneg %p147
    $region35: #{tpu_custom_call.1} parent=1 // pred_check_branch
      %192 = sbr.rel (%p190) target = $region37
    $region36: #{tpu_custom_call.1} parent=1 // pred_region
      %v193 = vld [vmem:[%s6] sm:$0xff]
      %v194 = vld [vmem:[%s6 + $0x8] sm:$0xff]
      %195 = vadd.xlane.f32.xlu0 %v188
      %v196 = vpop.xlane.xlu0 %195
      %197 = vadd.xlane.f32.xlu0 %v189
      %v198 = vpop.xlane.xlu0 %197
      %v199 = vadd.f32 %v193, %v196
      %v200 = vadd.f32 %v194, %v198
      %vm201 = vcmask 7168
      %202 = vst.msk [vmem:[%s6] sm:$0xff] %vm201, %v199
      %203 = vst.msk [vmem:[%s6 + $0x8] sm:$0xff] %vm201, %v200
    $region37: #{tpu_custom_call.1} parent=1 // pred_fallthru
      _
    // Predicated region
    $region38: #{tpu_custom_call.1} parent=1 // pred_check
      %p204 = pneg %p148
    $region39: #{tpu_custom_call.1} parent=1 // pred_check_branch
      %206 = sbr.rel (%p204) target = $region41
    $region40: #{tpu_custom_call.1} parent=1 // pred_region
      %v207 = vld [vmem:[%s6] sm:$0xff]
      %v208 = vld [vmem:[%s6 + $0x8] sm:$0xff]
      %v209 = vsel %vm130, 1, 0
      %v210 = vlaneseq
      %v211 = vshrl.u32 %v210, 7
      %v212 = vsub.s32 0, %v211
      %v213 = vrot.slane %v209, %v212
      %vm214 = vcmp.eq.s32.totalorder %v213, 1
      %v215 = vsel %vm214, %v188, 0.0
      %v216 = vsel %vm214, %v189, 0.0
      %217 = vadd.xlane.f32.xlu0 %v215
      %v218 = vpop.xlane.xlu0 %217
      %219 = vadd.xlane.f32.xlu0 %v216
      %v220 = vpop.xlane.xlu0 %219
      %v221 = vadd.f32 %v207, %v218
      %v222 = vadd.f32 %v208, %v220
      %vm223 = vcmask 7168
      %224 = vst.msk [vmem:[%s6] sm:$0xff] %vm223, %v221
      %225 = vst.msk [vmem:[%s6 + $0x8] sm:$0xff] %vm223, %v222
    $region41: #{tpu_custom_call.1} parent=1 // pred_fallthru
      _
    %p226 = scmp.gt.s32.totalorder %s146, 5
    %p227 = pnand %p226, %p149
    %p228 = pneg %p227
    // Predicated region
    $region42: #{tpu_custom_call.1} parent=1 // pred_check
      _
    $region43: #{tpu_custom_call.1} parent=1 // pred_check_branch
      %230 = sbr.rel (%p227) target = $region45
    $region44: #{tpu_custom_call.1} parent=1 // pred_region
      %231 = vadd.xlane.f32.xlu0 %v188
      %v232 = vpop.xlane.xlu0 %231
      %233 = vadd.xlane.f32.xlu0 %v189
      %v234 = vpop.xlane.xlu0 %233
      %v235 = vsel %vm130, 1, 0
      %v236 = vlaneseq
      %v237 = vshrl.u32 %v236, 7
      %v238 = vsub.s32 0, %v237
      %v239 = vrot.slane %v235, %v238
      %vm240 = vcmp.eq.s32.totalorder %v239, 1
      %v241 = vsel %vm240, %v188, 0.0
      %v242 = vsel %vm240, %v189, 0.0
      %243 = vadd.xlane.f32.xlu0 %v241
      %v244 = vpop.xlane.xlu0 %243
      %245 = vadd.xlane.f32.xlu0 %v242
      %v246 = vpop.xlane.xlu0 %245
      %v247 = vld [vmem:[%s6] sm:$0xff]
      %v248 = vld [vmem:[%s6 + $0x8] sm:$0xff]
      %vm249 = vcmp.lt.s32.totalorder %v136, 5
      %vm250 = vcmp.lt.s32.totalorder %v137, 5
      %v251 = vsel %vm249, %v232, %v244
      %v252 = vsel %vm250, %v234, %v246
      %v253 = vadd.f32 %v247, %v251
      %v254 = vadd.f32 %v248, %v252
      %vm255 = vcmask 7168
      %256 = vst.msk [vmem:[%s6] sm:$0xff] %vm255, %v253
      %257 = vst.msk [vmem:[%s6 + $0x8] sm:$0xff] %vm255, %v254
    $region45: #{tpu_custom_call.1} parent=1 // pred_fallthru
      _
    // Predicated region
    $region46: #{tpu_custom_call.1} parent=1 // pred_check
      _
    $region47: #{tpu_custom_call.1} parent=1 // pred_check_branch
      %259 = sbr.rel (0) target = $region49
    $region48: #{tpu_custom_call.1} parent=1 // pred_region
      _
    $region49: #{tpu_custom_call.1} parent=1 // pred_fallthru
      _
    // Predicated region
    $region50: #{tpu_custom_call.1} parent=1 // pred_check
      _
    $region51: #{tpu_custom_call.1} parent=1 // pred_check_branch
      %261 = sbr.rel (0) target = $region53
    $region52: #{tpu_custom_call.1} parent=1 // pred_region
      _
    $region53: #{tpu_custom_call.1} parent=1 // pred_fallthru
      _
    // Predicated region
    $region54: #{tpu_custom_call.1} parent=1 // pred_check
      _
    $region55: #{tpu_custom_call.1} parent=1 // pred_check_branch
      %263 = sbr.rel (0) target = $region57
    $region56: #{tpu_custom_call.1} parent=1 // pred_region
      _
    $region57: #{tpu_custom_call.1} parent=1 // pred_fallthru
      _
    // Predicated region
    $region58: #{tpu_custom_call.1} parent=1 // pred_check
      _
    $region59: #{tpu_custom_call.1} parent=1 // pred_check_branch
      %265 = sbr.rel (0) target = $region61
    $region60: #{tpu_custom_call.1} parent=1 // pred_region
      _
    $region61: #{tpu_custom_call.1} parent=1 // pred_fallthru
      _
    %266 = vsyncpa [#allocation3], 1

</llo_original>
